<compile_context>
chip_gen: v5e
topology: v5e:2x2
jax: 0.10.0
libtpu: 0.0.40
codegen_flags: <defaults>
</compile_context>

<pallas_src>
import jax
import jax.numpy as jnp
from jax.experimental import pallas as pl
from jax.experimental.pallas import tpu as pltpu


def coordinate_policy_kernel(xt_ref,    # (2, TILE_S)   coords^T tile (states on lanes)
                             w1_ref,    # (17, 2)       fc1 weights + constant-1 row
                             b1_ref,    # (17, 1)       fc1 bias (+1.0 seed for the ones row)
                             w2_ref,    # (33, 17)      fc2 weights | b2 column; row 32 re-emits the 1
                             w34_ref,   # (A, 33)       fc4∘fc3 weights | folded bias column
                             o_ref):    # (A, TILE_S)
    # fc1 (+ constant-1 row) on the MXU; the single remaining bias add seeds the 1.
    h = jnp.dot(w1_ref[...], xt_ref[...], preferred_element_type=jnp.float32) + b1_ref[...]
    h = jnp.maximum(h, 0.0)                                              # (17, S), row 16 == 1

    # fc2 + ReLU; b2 folded via the constant-1 column, row 32 re-emits the 1.
    h = jnp.maximum(jnp.dot(w2_ref[...], h, preferred_element_type=jnp.float32), 0.0)  # (33, S)

    # fc3 folded into fc4 (no ReLU between them in the reference module); bias folded too.
    logits = jnp.dot(w34_ref[...], h, preferred_element_type=jnp.float32)              # (A, S)

    # Stable softmax over actions (sublane axis). Exact normalization: the divide is not on
    # the binding slot, and it keeps per-state probability sums at machine precision.
    m = jnp.max(logits, axis=0, keepdims=True)                           # (1, S)
    e = jnp.exp(logits - m)                                              # (A, S)
    o_ref[...] = e / jnp.sum(e, axis=0, keepdims=True)


def _pick_tile_s(n_states, cap=32768):
    """Multiple of 512, aims for >=2 grid steps (v7x megacore), capped to keep VMEM modest."""
    half = (n_states + 1) // 2
    t = ((half + 511) // 512) * 512
    return int(max(512, min(cap, t)))


def coordinate_policy_forward(coords, params, *, tile_s=None, actions_major=False):
    """coords: (n_states, 2) float32.  params in PyTorch layout: w (out,in), b (out,).

    Returns (n_states, n_actions) probabilities (module semantics). Pass actions_major=True
    to get the kernel's native (n_actions, n_states) result with no epilogue transpose.
    """
    n_states = coords.shape[0]
    n_actions = params["w4"].shape[0]
    if tile_s is None:
        tile_s = _pick_tile_s(n_states)
    assert tile_s % 128 == 0
    f32 = jnp.float32

    # ---- host-side weight prep (tiny, O(1) work) ----
    # fc1 gains a 17th output row (weights 0, bias 1) carrying a constant 1 through the ReLUs.
    w1e = jnp.concatenate([params["w1"], jnp.zeros((1, 2), f32)], axis=0)            # (17, 2)
    b1e = jnp.concatenate([params["b1"], jnp.ones((1,), f32)], axis=0)[:, None]      # (17, 1)
    # fc2 with b2 folded in (column 16 multiplies the constant-1 row); row 32 re-emits the 1.
    w2a = jnp.concatenate([
        jnp.concatenate([params["w2"], params["b2"][:, None]], axis=1),              # (32, 17)
        jnp.zeros((1, 17), f32).at[0, 16].set(1.0),                                  # (1, 17)
    ], axis=0)                                                                       # (33, 17)
    # fc3 folded into fc4 (exact: no ReLU between them); bias folded via the constant-1 column.
    w34 = params["w4"] @ params["w3"]                                                # (A, 32)
    b34 = params["w4"] @ params["b3"] + params["b4"]                                 # (A,)
    w34a = jnp.concatenate([w34, b34[:, None]], axis=1)                              # (A, 33)

    # Lane-dense input layout; no zero-pad materialization (ragged last block handled by Pallas).
    xt = coords.T                                                                    # (2, N)

    grid = (pl.cdiv(n_states, tile_s),)
    const = lambda i: (0, 0)   # weights: same block every step -> stay VMEM-resident

    out_t = pl.pallas_call(
        coordinate_policy_kernel,
        out_shape=jax.ShapeDtypeStruct((n_actions, n_states), jnp.float32),
        grid=grid,
        in_specs=[
            pl.BlockSpec((2, tile_s), lambda i: (0, i)),      # coords^T tile
            pl.BlockSpec((17, 2), const),
            pl.BlockSpec((17, 1), const),
            pl.BlockSpec((33, 17), const),
            pl.BlockSpec((n_actions, 33), const),
        ],
        out_specs=pl.BlockSpec((n_actions, tile_s), lambda i: (0, i)),
        compiler_params=pltpu.CompilerParams(
            dimension_semantics=("parallel",),   # shards tiles across v7x's 2 TensorCores
            vmem_limit_bytes=48 << 20,           # headroom for 32K-state tiles; < v7x's 64 MiB
        ),
    )(xt, w1e, b1e, w2a, w34a)

    if actions_major:
        return out_t            # (A, N): no epilogue transpose / extra HBM pass
    return out_t.T              # (N, A): matches the PyTorch module's convention


def init_params(key, n_actions):
    """Deterministic init mimicking torch.nn.Linear default (uniform +/- 1/sqrt(fan_in)).
    Weights kept in PyTorch (out_features, in_features) layout."""
    dims = [(16, 2), (32, 16), (32, 32), (n_actions, 32)]
    params = {}
    for idx, (fan_out, fan_in) in enumerate(dims, start=1):
        key, kw, kb = jax.random.split(key, 3)
        bound = 1.0 / jnp.sqrt(jnp.float32(fan_in))
        params[f"w{idx}"] = jax.random.uniform(kw, (fan_out, fan_in), jnp.float32,
                                               minval=-bound, maxval=bound)
        params[f"b{idx}"] = jax.random.uniform(kb, (fan_out,), jnp.float32,
                                               minval=-bound, maxval=bound)
    return params


def reference_forward(coords, p):
    h = jnp.maximum(coords @ p["w1"].T + p["b1"], 0.0)
    h = jnp.maximum(h @ p["w2"].T + p["b2"], 0.0)
    h = h @ p["w3"].T + p["b3"]
    logits = h @ p["w4"].T + p["b4"]
    return jax.nn.softmax(logits, axis=1)


if __name__ == "__main__":
    key = jax.random.PRNGKey(0)
    n_states, n_actions = 16, 4

    k_coords, k_params = jax.random.split(key)
    # Synthetic "coordinates" for each state, shape (n_states, 2)
    coords = jax.random.uniform(k_coords, (n_states, 2), jnp.float32, minval=0.0, maxval=4.0)
    params = init_params(k_params, n_actions)

    out = jax.block_until_ready(coordinate_policy_forward(coords, params))
    ref = reference_forward(coords, params)
    assert out.shape == (n_states, n_actions)
    # bias/fc3-fc4 folding only reorders f32 rounding
    assert jnp.allclose(out, ref, atol=5e-4, rtol=5e-4)
    # exact normalization -> rows sum to 1 at machine precision
    assert jnp.allclose(jnp.sum(out, axis=1), jnp.ones(n_states), atol=1e-5)

    # Secondary check: ragged multi-tile path (partial last block) with a forced small tile.
    coords2 = jax.random.uniform(jax.random.PRNGKey(1), (1200, 2), jnp.float32,
                                 minval=0.0, maxval=4.0)
    out2 = jax.block_until_ready(coordinate_policy_forward(coords2, params, tile_s=512))
    assert jnp.allclose(out2, reference_forward(coords2, params), atol=5e-4, rtol=5e-4)

    print("KERNEL_OK")
</pallas_src>

<mosaic_0001>
module attributes {stable_mosaic.version = 11 : i64} {
  func.func @coordinate_policy_kernel(%arg0: i32, %arg1: memref<2x512xf32, #tpu.memory_space<vmem>>, %arg2: memref<17x2xf32, #tpu.memory_space<vmem>>, %arg3: memref<17x1xf32, #tpu.memory_space<vmem>>, %arg4: memref<33x17xf32, #tpu.memory_space<vmem>>, %arg5: memref<4x33xf32, #tpu.memory_space<vmem>>, %arg6: memref<4x512xf32, #tpu.memory_space<vmem>>) attributes {dimension_semantics = [#tpu.dimension_semantics<parallel>], iteration_bounds = array<i64: 1>, scalar_prefetch = 0 : i64, scratch_operands = 0 : i64, tpu.core_type = #tpu.core_type<tc>, window_params = [{transform_indices = @transform_0, window_bounds = array<i64: 2, 512>}, {pipeline_mode = #tpu.pipeline_mode<synchronous>, transform_indices = @transform_1, window_bounds = array<i64: 17, 2>}, {pipeline_mode = #tpu.pipeline_mode<synchronous>, transform_indices = @transform_2, window_bounds = array<i64: 17, 1>}, {pipeline_mode = #tpu.pipeline_mode<synchronous>, transform_indices = @transform_3, window_bounds = array<i64: 33, 17>}, {pipeline_mode = #tpu.pipeline_mode<synchronous>, transform_indices = @transform_4, window_bounds = array<i64: 4, 33>}, {transform_indices = @transform_5, window_bounds = array<i64: 4, 512>}]} {
    %c0 = arith.constant 0 : index
    %c0_0 = arith.constant 0 : index
    %0 = vector.load %arg2[%c0, %c0_0] : memref<17x2xf32, #tpu.memory_space<vmem>>, vector<17x2xf32>
    %c0_1 = arith.constant 0 : index
    %c0_2 = arith.constant 0 : index
    %1 = vector.load %arg1[%c0_1, %c0_2] : memref<2x512xf32, #tpu.memory_space<vmem>>, vector<2x512xf32>
    %cst = arith.constant dense<0.000000e+00> : vector<17x512xf32>
    %2 = tpu.matmul %0, %1, %cst {dimension_numbers = #tpu.dot_dimension_numbers<[1], [0], [0], [1], [0, 0, 1, 1], [], []>} : vector<17x2xf32>, vector<2x512xf32>, vector<17x512xf32> -> vector<17x512xf32>
    %c0_3 = arith.constant 0 : index
    %c0_4 = arith.constant 0 : index
    %3 = vector.load %arg3[%c0_3, %c0_4] : memref<17x1xf32, #tpu.memory_space<vmem>>, vector<17x1xf32>
    %4 = vector.broadcast %3 : vector<17x1xf32> to vector<17x512xf32>
    %5 = arith.addf %2, %4 : vector<17x512xf32>
    %cst_5 = arith.constant 0.000000e+00 : f32
    %6 = vector.broadcast %cst_5 : f32 to vector<17x512xf32>
    %7 = arith.maximumf %5, %6 : vector<17x512xf32>
    %c0_6 = arith.constant 0 : index
    %c0_7 = arith.constant 0 : index
    %8 = vector.load %arg4[%c0_6, %c0_7] : memref<33x17xf32, #tpu.memory_space<vmem>>, vector<33x17xf32>
    %cst_8 = arith.constant dense<0.000000e+00> : vector<33x512xf32>
    %9 = tpu.matmul %8, %7, %cst_8 {dimension_numbers = #tpu.dot_dimension_numbers<[1], [0], [0], [1], [0, 0, 1, 1], [], []>} : vector<33x17xf32>, vector<17x512xf32>, vector<33x512xf32> -> vector<33x512xf32>
    %cst_9 = arith.constant 0.000000e+00 : f32
    %10 = vector.broadcast %cst_9 : f32 to vector<33x512xf32>
    %11 = arith.maximumf %9, %10 : vector<33x512xf32>
    %c0_10 = arith.constant 0 : index
    %c0_11 = arith.constant 0 : index
    %12 = vector.load %arg5[%c0_10, %c0_11] : memref<4x33xf32, #tpu.memory_space<vmem>>, vector<4x33xf32>
    %cst_12 = arith.constant dense<0.000000e+00> : vector<4x512xf32>
    %13 = tpu.matmul %12, %11, %cst_12 {dimension_numbers = #tpu.dot_dimension_numbers<[1], [0], [0], [1], [0, 0, 1, 1], [], []>} : vector<4x33xf32>, vector<33x512xf32>, vector<4x512xf32> -> vector<4x512xf32>
    %cst_13 = arith.constant dense<0xFF800000> : vector<512xf32>
    %14 = vector.multi_reduction <maximumf>, %13, %cst_13 [0] : vector<4x512xf32> to vector<512xf32>
    %15 = vector.shape_cast %14 : vector<512xf32> to vector<1x512xf32>
    %16 = vector.broadcast %15 : vector<1x512xf32> to vector<4x512xf32>
    %17 = arith.subf %13, %16 : vector<4x512xf32>
    %18 = math.exp %17 : vector<4x512xf32>
    %cst_14 = arith.constant dense<0.000000e+00> : vector<512xf32>
    %19 = vector.multi_reduction <add>, %18, %cst_14 [0] : vector<4x512xf32> to vector<512xf32>
    %20 = vector.shape_cast %19 : vector<512xf32> to vector<1x512xf32>
    %21 = vector.broadcast %20 : vector<1x512xf32> to vector<4x512xf32>
    %22 = arith.divf %18, %21 : vector<4x512xf32>
    %c0_15 = arith.constant 0 : index
    %c0_16 = arith.constant 0 : index
    %23 = vector.load %arg6[%c0_15, %c0_16] : memref<4x512xf32, #tpu.memory_space<vmem>>, vector<4x512xf32>
    tpu.vector_store %arg6[%c0_15, %c0_16], %22 {strides = array<i32>} : memref<4x512xf32, #tpu.memory_space<vmem>>, vector<4x512xf32>,
    return
  }
  func.func @transform_0(%arg0: i32) -> (i32, i32) {
    %c0_i32 = arith.constant 0 : i32
    %c0_i32_0 = arith.constant 0 : i32
    return %c0_i32, %arg0 : i32, i32
  }
  func.func @transform_1(%arg0: i32) -> (i32, i32) {
    %c0_i32 = arith.constant 0 : i32
    %c0_i32_0 = arith.constant 0 : i32
    %c0_i32_1 = arith.constant 0 : i32
    return %c0_i32, %c0_i32_0 : i32, i32
  }
  func.func @transform_2(%arg0: i32) -> (i32, i32) {
    %c0_i32 = arith.constant 0 : i32
    %c0_i32_0 = arith.constant 0 : i32
    %c0_i32_1 = arith.constant 0 : i32
    return %c0_i32, %c0_i32_0 : i32, i32
  }
  func.func @transform_3(%arg0: i32) -> (i32, i32) {
    %c0_i32 = arith.constant 0 : i32
    %c0_i32_0 = arith.constant 0 : i32
    %c0_i32_1 = arith.constant 0 : i32
    return %c0_i32, %c0_i32_0 : i32, i32
  }
  func.func @transform_4(%arg0: i32) -> (i32, i32) {
    %c0_i32 = arith.constant 0 : i32
    %c0_i32_0 = arith.constant 0 : i32
    %c0_i32_1 = arith.constant 0 : i32
    return %c0_i32, %c0_i32_0 : i32, i32
  }
  func.func @transform_5(%arg0: i32) -> (i32, i32) {
    %c0_i32 = arith.constant 0 : i32
    %c0_i32_0 = arith.constant 0 : i32
    return %c0_i32, %arg0 : i32, i32
  }
}

</mosaic_0001>

<llo_original>
// kernel: tpu_custom_call.1
$region0: #{tpu_custom_call.1}
  #allocation0 [shape = 'u32[]', space=smem, size = 0x4, offset = 0x4, fixed_abs, tag = 'smem constant byte address 0x4 - core index']
  #allocation1 [shape = 'u32[72,128]{1,0:T(1,128)}', space=vmem, size = 0x9000, scoped, tag = 'internal scratch']
  %s0 = inlined_call_operand.vmem [shape: f32[2,16], index: 0, kind: input, shape index: {}]
  %s1 = inlined_call_operand.vmem [shape: f32[17,2], index: 1, kind: input, shape index: {}]
  %s2 = inlined_call_operand.vmem [shape: f32[17,1], index: 2, kind: input, shape index: {}]
  %s3 = inlined_call_operand.vmem [shape: f32[33,17], index: 3, kind: input, shape index: {}]
  %s4 = inlined_call_operand.vmem [shape: f32[4,33], index: 4, kind: input, shape index: {}]
  %s5 = inlined_call_operand.hbm [shape: f32[4,16], index: 5, kind: output, shape index: {}]
  %s6 = sld [smem:[#allocation0]]
  $region30: #{tpu_custom_call.1} parent=0
    _
  %s8 = ssub.s32 1, %s6
  %s9 = scalar_select 0, %s8, %s6
  $region1: #{tpu_custom_call.1} parent=0
    #allocation2 [shape = 'u8[8192]{0}', space=vmem, size = 0x2000, scoped, tag = 'output window, operand 0, single buffered']
    #allocation3 [shape = 's32[1]{0}', space=sflag, size = 0x4, scoped, tag = 'scoped memory for tpu_custom_call.1']
    %10 = vsyncpa [#allocation3], 0
    // Predicated region
    $region2: #{tpu_custom_call.1} parent=1 // pred_check
      _
    $region3: #{tpu_custom_call.1} parent=1 // pred_check_branch
      %12 = sbr.rel (0) target = $region5
    $region4: #{tpu_custom_call.1} parent=1 // pred_region
      _
    $region5: #{tpu_custom_call.1} parent=1 // pred_fallthru
      _
    // Predicated region
    $region6: #{tpu_custom_call.1} parent=1 // pred_check
      _
    $region7: #{tpu_custom_call.1} parent=1 // pred_check_branch
      %14 = sbr.rel (0) target = $region9
    $region8: #{tpu_custom_call.1} parent=1 // pred_region
      _
    $region9: #{tpu_custom_call.1} parent=1 // pred_fallthru
      _
    // Predicated region
    $region10: #{tpu_custom_call.1} parent=1 // pred_check
      _
    $region11: #{tpu_custom_call.1} parent=1 // pred_check_branch
      %16 = sbr.rel (0) target = $region13
    $region12: #{tpu_custom_call.1} parent=1 // pred_region
      _
    $region13: #{tpu_custom_call.1} parent=1 // pred_fallthru
      _
    // Predicated region
    $region14: #{tpu_custom_call.1} parent=1 // pred_check
      _
    $region15: #{tpu_custom_call.1} parent=1 // pred_check_branch
      %18 = sbr.rel (0) target = $region17
    $region16: #{tpu_custom_call.1} parent=1 // pred_region
      _
    $region17: #{tpu_custom_call.1} parent=1 // pred_fallthru
      _
    // Predicated region
    $region18: #{tpu_custom_call.1} parent=1 // pred_check
      _
    $region19: #{tpu_custom_call.1} parent=1 // pred_check_branch
      %20 = sbr.rel (0) target = $region21
    $region20: #{tpu_custom_call.1} parent=1 // pred_region
      _
    $region21: #{tpu_custom_call.1} parent=1 // pred_fallthru
      _
    %v21 = vld [vmem:[%s1] sm:$0xff]
    %v22 = vld [vmem:[%s1 + $0x8] sm:$0xff]
    %v23 = vld [vmem:[%s1 + $0x10] sm:$0x1]
    %v24 = vld [vmem:[%s0] sm:$0xff]
    %v25 = vld [vmem:[%s2] sm:$0xff]
    %v26 = vld [vmem:[%s2 + $0x8] sm:$0xff]
    %v27 = vld [vmem:[%s2 + $0x10] sm:$0x1]
    %29 = vset.pattern.permute.xlu0 0
    %30 = vperm.xlu0 %29, %v25
    %v31 = vpop.permute.xlu0 %30
    %34 = vset.pattern.permute.xlu0 0
    %35 = vperm.xlu0 %34, %v26
    %v36 = vpop.permute.xlu0 %35
    %39 = vset.pattern.permute.xlu0 0
    %40 = vperm.xlu0 %39, %v27
    %v41 = vpop.permute.xlu0 %40
    %44 = vst [vmem:[#allocation1] ss:$4 sm:$0xff] %v24
    %v45 = vld.sshfl [vmem:[#allocation1] sm:$0xff pattern:$0x73625140]
    %v46 = vld.sshfl [vmem:[#allocation1 + $0x8] sm:$0xff pattern:$0x73625140]
    %v47 = vld.sshfl [vmem:[#allocation1 + $0x10] sm:$0xff pattern:$0x73625140]
    %v48 = vld.sshfl [vmem:[#allocation1 + $0x18] sm:$0xff pattern:$0x73625140]
    %vm49 = vcmask 15360
    %v51 = vsel %vm49, %v21, 0
    %v54 = vsel %vm49, %v22, 0
    %v57 = vsel %vm49, %v23, 0
    %vm59 = vcmask 1041408
    %v60 = vsel %vm59, %v45, 0
    %v62 = vsel %vm59, %v46, 0
    %v64 = vsel %vm59, %v47, 0
    %v66 = vsel %vm59, %v48, 0
    %68 = vmatpush.msra.mxu0 0.0
    %69 = vmatpush.msra.mxu0 0.0
    %70 = vmatpush.msra.mxu0 0.0
    %71 = vmatpush.msra.mxu0 0.0
    %72 = vmatpush.msra.mxu0 0.0
    %73 = vmatpush.msra.mxu0 0.0
    %74 = vmatpush.msra.mxu0 0.0
    %75 = vmatpush.msra.mxu0 0.0
    %76 = vmatpush.msra.mxu0 0.0
    %77 = vmatpush.msra.mxu0 0.0
    %78 = vmatpush.msra.mxu0 0.0
    %79 = vmatpush.msra.mxu0 0.0
    %80 = vmatpush.msra.mxu0 0.0
    %81 = vmatpush.msra.mxu0 0.0
    %82 = vmatpush.msra.mxu0 0.0
    %83 = vmatpush.msra.mxu0 %v60
    %84 = vmatmul.f32.gmra.mxu0 %v51
    %v85 = vpop.f32.mrf.mxu0
    %v86 = vadd.f32 %v31, %v85
    %87 = vmatmul.f32.gmra.mxu0 %v54
    %v88 = vpop.f32.mrf.mxu0
    %v89 = vadd.f32 %v36, %v88
    %90 = vmatmul.f32.gmra.mxu0 %v57
    %v91 = vpop.f32.mrf.mxu0
    %v92 = vadd.f32 %v41, %v91
    %93 = vdwg.mxu0
    %94 = vmatpush.msra.mxu0 0.0
    %95 = vmatpush.msra.mxu0 0.0
    %96 = vmatpush.msra.mxu0 0.0
    %97 = vmatpush.msra.mxu0 0.0
    %98 = vmatpush.msra.mxu0 0.0
    %99 = vmatpush.msra.mxu0 0.0
    %100 = vmatpush.msra.mxu0 0.0
    %101 = vmatpush.msra.mxu0 0.0
    %102 = vmatpush.msra.mxu0 0.0
    %103 = vmatpush.msra.mxu0 0.0
    %104 = vmatpush.msra.mxu0 0.0
    %105 = vmatpush.msra.mxu0 0.0
    %106 = vmatpush.msra.mxu0 0.0
    %107 = vmatpush.msra.mxu0 0.0
    %108 = vmatpush.msra.mxu0 0.0
    %109 = vmatpush.msra.mxu0 %v62
    %110 = vmatmul.f32.gmra.mxu0 %v51
    %v111 = vpop.f32.mrf.mxu0
    %v112 = vadd.f32 %v31, %v111
    %113 = vmatmul.f32.gmra.mxu0 %v54
    %v114 = vpop.f32.mrf.mxu0
    %v115 = vadd.f32 %v36, %v114
    %116 = vmatmul.f32.gmra.mxu0 %v57
    %v117 = vpop.f32.mrf.mxu0
    %v118 = vadd.f32 %v41, %v117
    %119 = vdwg.mxu0
    %120 = vmatpush.msra.mxu0 0.0
    %121 = vmatpush.msra.mxu0 0.0
    %122 = vmatpush.msra.mxu0 0.0
    %123 = vmatpush.msra.mxu0 0.0
    %124 = vmatpush.msra.mxu0 0.0
    %125 = vmatpush.msra.mxu0 0.0
    %126 = vmatpush.msra.mxu0 0.0
    %127 = vmatpush.msra.mxu0 0.0
    %128 = vmatpush.msra.mxu0 0.0
    %129 = vmatpush.msra.mxu0 0.0
    %130 = vmatpush.msra.mxu0 0.0
    %131 = vmatpush.msra.mxu0 0.0
    %132 = vmatpush.msra.mxu0 0.0
    %133 = vmatpush.msra.mxu0 0.0
    %134 = vmatpush.msra.mxu0 0.0
    %135 = vmatpush.msra.mxu0 %v64
    %136 = vmatmul.f32.gmra.mxu0 %v51
    %v137 = vpop.f32.mrf.mxu0
    %v138 = vadd.f32 %v31, %v137
    %139 = vmatmul.f32.gmra.mxu0 %v54
    %v140 = vpop.f32.mrf.mxu0
    %v141 = vadd.f32 %v36, %v140
    %142 = vmatmul.f32.gmra.mxu0 %v57
    %v143 = vpop.f32.mrf.mxu0
    %v144 = vadd.f32 %v41, %v143
    %145 = vdwg.mxu0
    %146 = vmatpush.msra.mxu0 0.0
    %147 = vmatpush.msra.mxu0 0.0
    %148 = vmatpush.msra.mxu0 0.0
    %149 = vmatpush.msra.mxu0 0.0
    %150 = vmatpush.msra.mxu0 0.0
    %151 = vmatpush.msra.mxu0 0.0
    %152 = vmatpush.msra.mxu0 0.0
    %153 = vmatpush.msra.mxu0 0.0
    %154 = vmatpush.msra.mxu0 0.0
    %155 = vmatpush.msra.mxu0 0.0
    %156 = vmatpush.msra.mxu0 0.0
    %157 = vmatpush.msra.mxu0 0.0
    %158 = vmatpush.msra.mxu0 0.0
    %159 = vmatpush.msra.mxu0 0.0
    %160 = vmatpush.msra.mxu0 0.0
    %161 = vmatpush.msra.mxu0 %v66
    %162 = vmatmul.f32.gmra.mxu0 %v51
    %v163 = vpop.f32.mrf.mxu0
    %v164 = vadd.f32 %v31, %v163
    %165 = vmatmul.f32.gmra.mxu0 %v54
    %v166 = vpop.f32.mrf.mxu0
    %v167 = vadd.f32 %v36, %v166
    %168 = vmatmul.f32.gmra.mxu0 %v57
    %v169 = vpop.f32.mrf.mxu0
    %v170 = vadd.f32 %v41, %v169
    %171 = vdwg.mxu0
    %v172 = vmax.f32 %v86, 0.0
    %v173 = vmax.f32 %v112, 0.0
    %v174 = vmax.f32 %v138, 0.0
    %v175 = vmax.f32 %v164, 0.0
    %v176 = vmax.f32 %v89, 0.0
    %v177 = vmax.f32 %v115, 0.0
    %v178 = vmax.f32 %v141, 0.0
    %v179 = vmax.f32 %v167, 0.0
    %v180 = vmax.f32 %v92, 0.0
    %v181 = vmax.f32 %v118, 0.0
    %v182 = vmax.f32 %v144, 0.0
    %v183 = vmax.f32 %v170, 0.0
    %v184 = vld [vmem:[%s3] sm:$0xff]
    %v185 = vld [vmem:[%s3 + $0x8] sm:$0xff]
    %v186 = vld [vmem:[%s3 + $0x10] sm:$0xff]
    %v187 = vld [vmem:[%s3 + $0x18] sm:$0xff]
    %v188 = vld [vmem:[%s3 + $0x20] sm:$0x1]
    %vm189 = vcmask 138240
    %v191 = vsel %vm189, %v184, 0
    %v194 = vsel %vm189, %v185, 0
    %v197 = vsel %vm189, %v186, 0
    %v200 = vsel %vm189, %v187, 0
    %v203 = vsel %vm189, %v188, 0
    %vm205 = vcmask 1040384
    %v207 = vsel %vm205, %v180, 0
    %v210 = vsel %vm205, %v181, 0
    %v213 = vsel %vm205, %v182, 0
    %v216 = vsel %vm205, %v183, 0
    %218 = vmatpush.msra.mxu0 0.0
    %219 = vmatpush.msra.mxu0 0.0
    %220 = vmatpush.msra.mxu0 0.0
    %221 = vmatpush.msra.mxu0 0.0
    %222 = vmatpush.msra.mxu0 0.0
    %223 = vmatpush.msra.mxu0 0.0
    %224 = vmatpush.msra.mxu0 0.0
    %225 = vmatpush.msra.mxu0 0.0
    %226 = vmatpush.msra.mxu0 0.0
    %227 = vmatpush.msra.mxu0 0.0
    %228 = vmatpush.msra.mxu0 0.0
    %229 = vmatpush.msra.mxu0 0.0
    %230 = vmatpush.msra.mxu0 0.0
    %231 = vmatpush.msra.mxu0 %v207
    %232 = vmatpush.msra.mxu0 %v176
    %233 = vmatpush.msra.mxu0 %v172
    %234 = vmatmul.f32.gmra.mxu0 %v191
    %v235 = vpop.f32.mrf.mxu0
    %v236 = vadd.f32 0.0, %v235
    %237 = vmatmul.f32.gmra.mxu0 %v194
    %v238 = vpop.f32.mrf.mxu0
    %v239 = vadd.f32 0.0, %v238
    %240 = vmatmul.f32.gmra.mxu0 %v197
    %v241 = vpop.f32.mrf.mxu0
    %v242 = vadd.f32 0.0, %v241
    %243 = vmatmul.f32.gmra.mxu0 %v200
    %v244 = vpop.f32.mrf.mxu0
    %v245 = vadd.f32 0.0, %v244
    %246 = vmatmul.f32.gmra.mxu0 %v203
    %v247 = vpop.f32.mrf.mxu0
    %v248 = vadd.f32 0.0, %v247
    %249 = vdwg.mxu0
    %250 = vmatpush.msra.mxu0 0.0
    %251 = vmatpush.msra.mxu0 0.0
    %252 = vmatpush.msra.mxu0 0.0
    %253 = vmatpush.msra.mxu0 0.0
    %254 = vmatpush.msra.mxu0 0.0
    %255 = vmatpush.msra.mxu0 0.0
    %256 = vmatpush.msra.mxu0 0.0
    %257 = vmatpush.msra.mxu0 0.0
    %258 = vmatpush.msra.mxu0 0.0
    %259 = vmatpush.msra.mxu0 0.0
    %260 = vmatpush.msra.mxu0 0.0
    %261 = vmatpush.msra.mxu0 0.0
    %262 = vmatpush.msra.mxu0 0.0
    %263 = vmatpush.msra.mxu0 %v210
    %264 = vmatpush.msra.mxu0 %v177
    %265 = vmatpush.msra.mxu0 %v173
    %266 = vmatmul.f32.gmra.mxu0 %v191
    %v267 = vpop.f32.mrf.mxu0
    %v268 = vadd.f32 0.0, %v267
    %269 = vmatmul.f32.gmra.mxu0 %v194
    %v270 = vpop.f32.mrf.mxu0
    %v271 = vadd.f32 0.0, %v270
    %272 = vmatmul.f32.gmra.mxu0 %v197
    %v273 = vpop.f32.mrf.mxu0
    %v274 = vadd.f32 0.0, %v273
    %275 = vmatmul.f32.gmra.mxu0 %v200
    %v276 = vpop.f32.mrf.mxu0
    %v277 = vadd.f32 0.0, %v276
    %278 = vmatmul.f32.gmra.mxu0 %v203
    %v279 = vpop.f32.mrf.mxu0
    %v280 = vadd.f32 0.0, %v279
    %281 = vdwg.mxu0
    %282 = vmatpush.msra.mxu0 0.0
    %283 = vmatpush.msra.mxu0 0.0
    %284 = vmatpush.msra.mxu0 0.0
    %285 = vmatpush.msra.mxu0 0.0
    %286 = vmatpush.msra.mxu0 0.0
    %287 = vmatpush.msra.mxu0 0.0
    %288 = vmatpush.msra.mxu0 0.0
    %289 = vmatpush.msra.mxu0 0.0
    %290 = vmatpush.msra.mxu0 0.0
    %291 = vmatpush.msra.mxu0 0.0
    %292 = vmatpush.msra.mxu0 0.0
    %293 = vmatpush.msra.mxu0 0.0
    %294 = vmatpush.msra.mxu0 0.0
    %295 = vmatpush.msra.mxu0 %v213
    %296 = vmatpush.msra.mxu0 %v178
    %297 = vmatpush.msra.mxu0 %v174
    %298 = vmatmul.f32.gmra.mxu0 %v191
    %v299 = vpop.f32.mrf.mxu0
    %v300 = vadd.f32 0.0, %v299
    %301 = vmatmul.f32.gmra.mxu0 %v194
    %v302 = vpop.f32.mrf.mxu0
    %v303 = vadd.f32 0.0, %v302
    %304 = vmatmul.f32.gmra.mxu0 %v197
    %v305 = vpop.f32.mrf.mxu0
    %v306 = vadd.f32 0.0, %v305
    %307 = vmatmul.f32.gmra.mxu0 %v200
    %v308 = vpop.f32.mrf.mxu0
    %v309 = vadd.f32 0.0, %v308
    %310 = vmatmul.f32.gmra.mxu0 %v203
    %v311 = vpop.f32.mrf.mxu0
    %v312 = vadd.f32 0.0, %v311
    %313 = vdwg.mxu0
    %314 = vmatpush.msra.mxu0 0.0
    %315 = vmatpush.msra.mxu0 0.0
    %316 = vmatpush.msra.mxu0 0.0
    %317 = vmatpush.msra.mxu0 0.0
    %318 = vmatpush.msra.mxu0 0.0
    %319 = vmatpush.msra.mxu0 0.0
    %320 = vmatpush.msra.mxu0 0.0
    %321 = vmatpush.msra.mxu0 0.0
    %322 = vmatpush.msra.mxu0 0.0
    %323 = vmatpush.msra.mxu0 0.0
    %324 = vmatpush.msra.mxu0 0.0
    %325 = vmatpush.msra.mxu0 0.0
    %326 = vmatpush.msra.mxu0 0.0
    %327 = vmatpush.msra.mxu0 %v216
    %328 = vmatpush.msra.mxu0 %v179
    %329 = vmatpush.msra.mxu0 %v175
    %330 = vmatmul.f32.gmra.mxu0 %v191
    %v331 = vpop.f32.mrf.mxu0
    %v332 = vadd.f32 0.0, %v331
    %333 = vmatmul.f32.gmra.mxu0 %v194
    %v334 = vpop.f32.mrf.mxu0
    %v335 = vadd.f32 0.0, %v334
    %336 = vmatmul.f32.gmra.mxu0 %v197
    %v337 = vpop.f32.mrf.mxu0
    %v338 = vadd.f32 0.0, %v337
    %339 = vmatmul.f32.gmra.mxu0 %v200
    %v340 = vpop.f32.mrf.mxu0
    %v341 = vadd.f32 0.0, %v340
    %342 = vmatmul.f32.gmra.mxu0 %v203
    %v343 = vpop.f32.mrf.mxu0
    %v344 = vadd.f32 0.0, %v343
    %345 = vdwg.mxu0
    %v346 = vmax.f32 %v236, 0.0
    %v347 = vmax.f32 %v268, 0.0
    %v348 = vmax.f32 %v300, 0.0
    %v349 = vmax.f32 %v332, 0.0
    %v350 = vmax.f32 %v239, 0.0
    %v351 = vmax.f32 %v271, 0.0
    %v352 = vmax.f32 %v303, 0.0
    %v353 = vmax.f32 %v335, 0.0
    %v354 = vmax.f32 %v242, 0.0
    %v355 = vmax.f32 %v274, 0.0
    %v356 = vmax.f32 %v306, 0.0
    %v357 = vmax.f32 %v338, 0.0
    %v358 = vmax.f32 %v245, 0.0
    %v359 = vmax.f32 %v277, 0.0
    %v360 = vmax.f32 %v309, 0.0
    %v361 = vmax.f32 %v341, 0.0
    %v362 = vmax.f32 %v248, 0.0
    %v363 = vmax.f32 %v280, 0.0
    %v364 = vmax.f32 %v312, 0.0
    %v365 = vmax.f32 %v344, 0.0
    %v366 = vld [vmem:[%s4] sm:$0xf]
    %vm367 = vcmask 269312
    %v369 = vsel %vm367, %v366, 0
    %v372 = vsel %vm205, %v362, 0
    %v375 = vsel %vm205, %v363, 0
    %v378 = vsel %vm205, %v364, 0
    %v381 = vsel %vm205, %v365, 0
    %383 = vmatpush.msra.mxu0 0.0
    %384 = vmatpush.msra.mxu0 0.0
    %385 = vmatpush.msra.mxu0 0.0
    %386 = vmatpush.msra.mxu0 0.0
    %387 = vmatpush.msra.mxu0 0.0
    %388 = vmatpush.msra.mxu0 0.0
    %389 = vmatpush.msra.mxu0 0.0
    %390 = vmatpush.msra.mxu0 0.0
    %391 = vmatpush.msra.mxu0 0.0
    %392 = vmatpush.msra.mxu0 0.0
    %393 = vmatpush.msra.mxu0 0.0
    %394 = vmatpush.msra.mxu0 %v372
    %395 = vmatpush.msra.mxu0 %v358
    %396 = vmatpush.msra.mxu0 %v354
    %397 = vmatpush.msra.mxu0 %v350
    %398 = vmatpush.msra.mxu0 %v346
    %399 = vmatmul.f32.gmra.mxu0 %v369
    %v400 = vpop.f32.mrf.mxu0
    %v401 = vadd.f32 0.0, %v400
    %402 = vdwg.mxu0
    %403 = vmatpush.msra.mxu0 0.0
    %404 = vmatpush.msra.mxu0 0.0
    %405 = vmatpush.msra.mxu0 0.0
    %406 = vmatpush.msra.mxu0 0.0
    %407 = vmatpush.msra.mxu0 0.0
    %408 = vmatpush.msra.mxu0 0.0
    %409 = vmatpush.msra.mxu0 0.0
    %410 = vmatpush.msra.mxu0 0.0
    %411 = vmatpush.msra.mxu0 0.0
    %412 = vmatpush.msra.mxu0 0.0
    %413 = vmatpush.msra.mxu0 0.0
    %414 = vmatpush.msra.mxu0 %v375
    %415 = vmatpush.msra.mxu0 %v359
    %416 = vmatpush.msra.mxu0 %v355
    %417 = vmatpush.msra.mxu0 %v351
    %418 = vmatpush.msra.mxu0 %v347
    %419 = vmatmul.f32.gmra.mxu0 %v369
    %v420 = vpop.f32.mrf.mxu0
    %v421 = vadd.f32 0.0, %v420
    %422 = vdwg.mxu0
    %423 = vmatpush.msra.mxu0 0.0
    %424 = vmatpush.msra.mxu0 0.0
    %425 = vmatpush.msra.mxu0 0.0
    %426 = vmatpush.msra.mxu0 0.0
    %427 = vmatpush.msra.mxu0 0.0
    %428 = vmatpush.msra.mxu0 0.0
    %429 = vmatpush.msra.mxu0 0.0
    %430 = vmatpush.msra.mxu0 0.0
    %431 = vmatpush.msra.mxu0 0.0
    %432 = vmatpush.msra.mxu0 0.0
    %433 = vmatpush.msra.mxu0 0.0
    %434 = vmatpush.msra.mxu0 %v378
    %435 = vmatpush.msra.mxu0 %v360
    %436 = vmatpush.msra.mxu0 %v356
    %437 = vmatpush.msra.mxu0 %v352
    %438 = vmatpush.msra.mxu0 %v348
    %439 = vmatmul.f32.gmra.mxu0 %v369
    %v440 = vpop.f32.mrf.mxu0
    %v441 = vadd.f32 0.0, %v440
    %442 = vdwg.mxu0
    %443 = vmatpush.msra.mxu0 0.0
    %444 = vmatpush.msra.mxu0 0.0
    %445 = vmatpush.msra.mxu0 0.0
    %446 = vmatpush.msra.mxu0 0.0
    %447 = vmatpush.msra.mxu0 0.0
    %448 = vmatpush.msra.mxu0 0.0
    %449 = vmatpush.msra.mxu0 0.0
    %450 = vmatpush.msra.mxu0 0.0
    %451 = vmatpush.msra.mxu0 0.0
    %452 = vmatpush.msra.mxu0 0.0
    %453 = vmatpush.msra.mxu0 0.0
    %454 = vmatpush.msra.mxu0 %v381
    %455 = vmatpush.msra.mxu0 %v361
    %456 = vmatpush.msra.mxu0 %v357
    %457 = vmatpush.msra.mxu0 %v353
    %458 = vmatpush.msra.mxu0 %v349
    %459 = vmatmul.f32.gmra.mxu0 %v369
    %v460 = vpop.f32.mrf.mxu0
    %v461 = vadd.f32 0.0, %v460
    %462 = vdwg.mxu0
    %vm463 = vcmask 1043456
    %v464 = vsel %vm463, %v401, -inf
    %v465 = vrot.slane %v464, 4
    %v466 = vmax.f32 %v464, %v465
    %v467 = vrot.slane %v466, 2
    %v468 = vmax.f32 %v466, %v467
    %v469 = vrot.slane %v468, 1
    %v470 = vmax.f32 %v468, %v469
    %v471 = vsel %vm463, %v421, -inf
    %v472 = vrot.slane %v471, 4
    %v473 = vmax.f32 %v471, %v472
    %v474 = vrot.slane %v473, 2
    %v475 = vmax.f32 %v473, %v474
    %v476 = vrot.slane %v475, 1
    %v477 = vmax.f32 %v475, %v476
    %v478 = vsel %vm463, %v441, -inf
    %v479 = vrot.slane %v478, 4
    %v480 = vmax.f32 %v478, %v479
    %v481 = vrot.slane %v480, 2
    %v482 = vmax.f32 %v480, %v481
    %v483 = vrot.slane %v482, 1
    %v484 = vmax.f32 %v482, %v483
    %v485 = vsel %vm463, %v461, -inf
    %v486 = vrot.slane %v485, 4
    %v487 = vmax.f32 %v485, %v486
    %v488 = vrot.slane %v487, 2
    %v489 = vmax.f32 %v487, %v488
    %v490 = vrot.slane %v489, 1
    %v491 = vmax.f32 %v489, %v490
    %v492 = vsub.f32 %v401, %v470
    %v493 = vsub.f32 %v421, %v477
    %v494 = vsub.f32 %v441, %v484
    %v495 = vsub.f32 %v461, %v491
    %v496 = vmul.f32 %v492, 1.442695
    %v497 = vpow.pop %v496
    %v498 = vmul.f32 %v493, 1.442695
    %v499 = vpow.pop %v498
    %v500 = vmul.f32 %v494, 1.442695
    %v501 = vpow.pop %v500
    %v502 = vmul.f32 %v495, 1.442695
    %v503 = vpow.pop %v502
    %v504 = vsel %vm463, %v497, 0.0
    %v505 = vrot.slane %v504, 4
    %v506 = vadd.f32 %v504, %v505
    %v507 = vrot.slane %v506, 2
    %v508 = vadd.f32 %v506, %v507
    %v509 = vrot.slane %v508, 1
    %v510 = vadd.f32 %v508, %v509
    %v511 = vsel %vm463, %v499, 0.0
    %v512 = vrot.slane %v511, 4
    %v513 = vadd.f32 %v511, %v512
    %v514 = vrot.slane %v513, 2
    %v515 = vadd.f32 %v513, %v514
    %v516 = vrot.slane %v515, 1
    %v517 = vadd.f32 %v515, %v516
    %v518 = vsel %vm463, %v501, 0.0
    %v519 = vrot.slane %v518, 4
    %v520 = vadd.f32 %v518, %v519
    %v521 = vrot.slane %v520, 2
    %v522 = vadd.f32 %v520, %v521
    %v523 = vrot.slane %v522, 1
    %v524 = vadd.f32 %v522, %v523
    %v525 = vsel %vm463, %v503, 0.0
    %v526 = vrot.slane %v525, 4
    %v527 = vadd.f32 %v525, %v526
    %v528 = vrot.slane %v527, 2
    %v529 = vadd.f32 %v527, %v528
    %v530 = vrot.slane %v529, 1
    %v531 = vadd.f32 %v529, %v530
    %v532 = vrcp.pop %v510
    %v533 = vmul.f32 %v510, %v532
    %v534 = vsub.f32 1.0, %v533
    %v535 = vmul.f32 %v532, %v534
    %v536 = vadd.f32 %v532, %v535
    %vm537 = vweird.f32 %v510
    %vm538 = vweird.f32 %v532
    %vm539 = vmor %vm537, %vm538
    %v540 = vsel %vm539, %v532, %v536
    %v541 = vand.u32 2147483647, %v510
    %vm542 = vcmp.eq.f32.partialorder %v541, 8.507059e+37
    %v543 = vand.u32 %v510, 2147483648
    %v544 = vor.u32 1.1754944e-38, %v543
    %v545 = vsel %vm542, %v544, %v540
    %v546 = vmul.f32 %v497, %v545
    %v547 = vrcp.pop %v517
    %v548 = vmul.f32 %v517, %v547
    %v549 = vsub.f32 1.0, %v548
    %v550 = vmul.f32 %v547, %v549
    %v551 = vadd.f32 %v547, %v550
    %vm552 = vweird.f32 %v517
    %vm553 = vweird.f32 %v547
    %vm554 = vmor %vm552, %vm553
    %v555 = vsel %vm554, %v547, %v551
    %v556 = vand.u32 2147483647, %v517
    %vm557 = vcmp.eq.f32.partialorder %v556, 8.507059e+37
    %v558 = vand.u32 %v517, 2147483648
    %v559 = vor.u32 1.1754944e-38, %v558
    %v560 = vsel %vm557, %v559, %v555
    %v561 = vmul.f32 %v499, %v560
    %v562 = vrcp.pop %v524
    %v563 = vmul.f32 %v524, %v562
    %v564 = vsub.f32 1.0, %v563
    %v565 = vmul.f32 %v562, %v564
    %v566 = vadd.f32 %v562, %v565
    %vm567 = vweird.f32 %v524
    %vm568 = vweird.f32 %v562
    %vm569 = vmor %vm567, %vm568
    %v570 = vsel %vm569, %v562, %v566
    %v571 = vand.u32 2147483647, %v524
    %vm572 = vcmp.eq.f32.partialorder %v571, 8.507059e+37
    %v573 = vand.u32 %v524, 2147483648
    %v574 = vor.u32 1.1754944e-38, %v573
    %v575 = vsel %vm572, %v574, %v570
    %v576 = vmul.f32 %v501, %v575
    %v577 = vrcp.pop %v531
    %v578 = vmul.f32 %v531, %v577
    %v579 = vsub.f32 1.0, %v578
    %v580 = vmul.f32 %v577, %v579
    %v581 = vadd.f32 %v577, %v580
    %vm582 = vweird.f32 %v531
    %vm583 = vweird.f32 %v577
    %vm584 = vmor %vm582, %vm583
    %v585 = vsel %vm584, %v577, %v581
    %v586 = vand.u32 2147483647, %v531
    %vm587 = vcmp.eq.f32.partialorder %v586, 8.507059e+37
    %v588 = vand.u32 %v531, 2147483648
    %v589 = vor.u32 1.1754944e-38, %v588
    %v590 = vsel %vm587, %v589, %v585
    %v591 = vmul.f32 %v503, %v590
    %v596 = vrot.slane %v561, 4
    %v597 = vrot.slane %v591, 4
    %v598 = vsel %vm463, %v546, %v596
    %v599 = vsel %vm463, %v576, %v597
    %602 = vst [vmem:[#allocation2] sm:$0xff] %v598
    %603 = vst [vmem:[#allocation2 + $0x8] sm:$0xff] %v599
    // Predicated region
    $region22: #{tpu_custom_call.1} parent=1 // pred_check
      _
    $region23: #{tpu_custom_call.1} parent=1 // pred_check_branch
      %605 = sbr.rel (0) target = $region25
    $region24: #{tpu_custom_call.1} parent=1 // pred_region
      %607 = vsyncadd [#allocation3], 192
      %s609 = sshll.u32 [#allocation2], 4
      %s610 = int_to_ptr.vmem [resolvable:$true] %s609
      %s611 = sshll.u32 %s5, 4
      %s612 = int_to_ptr.hbm [resolvable:$true] %s611
      %614 = dma.vmem_to_hbm [thread:$0]  %s610, 64, %s612, [#allocation3]
    $region25: #{tpu_custom_call.1} parent=1 // pred_fallthru
      _
    // Predicated region
    $region26: #{tpu_custom_call.1} parent=1 // pred_check
      _
    $region27: #{tpu_custom_call.1} parent=1 // pred_check_branch
      %616 = sbr.rel (0) target = $region29
    $region28: #{tpu_custom_call.1} parent=1 // pred_region
      %618 = dma.done [#allocation3], 256
    $region29: #{tpu_custom_call.1} parent=1 // pred_fallthru
      _
    %619 = vsyncpa [#allocation3], 1

</llo_original>
